<compile_context>
chip_gen: v5e
topology: v5e:2x2
jax: 0.10.0
libtpu: 0.0.40
codegen_flags: <defaults>
</compile_context>

<pallas_src>
from functools import partial

import jax
import jax.numpy as jnp
from jax import lax
from jax.experimental import pallas as pl
from jax.experimental.pallas import tpu as pltpu

VOCAB = 17       # nt_vocab_size in the PyTorch module
VOCAB_PAD = 32   # vocab rows per sequence position, padded for clean tiling
LANE = 128       # TPU lane width; hidden/output feature dims padded to this


def _ceil_to(x, m):
    return ((x + m - 1) // m) * m


# --------------------------------------------------------------------------
# Kernel
# --------------------------------------------------------------------------
def _dnn_kernel(out_size, n_hidden, tok_ref, *refs):
    """refs = (w1_fused, b1, [w_i, b_i]*, w_out, b_out, out_ref).

    tok_ref : (TB, S) int32          -- token ids pre-offset by 32*s
    w1      : (S*VOCAB_PAD, H1_pad) bf16   -- fused first-layer weight (K=256)
    w_i     : (H_{i-1}_pad, H_i_pad) bf16,  b_i : (1, H_i_pad) f32
    w_out   : (H_last_pad, LANE) bf16,      b_out : (1, LANE) f32
    out_ref : (TB, out_size) f32
    """
    out_ref = refs[-1]
    params = refs[:-1]

    w1_ref = params[0]                       # (K, H1_pad) bf16
    b1 = params[1][...]                      # (1, H1_pad) f32

    tok_c = tok_ref[...]                     # (TB, S) int32, value in [32s, 32s+17)
    tb = tok_c.shape[0]
    seq_len = tok_c.shape[1]
    k = w1_ref.shape[0]                      # S * VOCAB_PAD (e.g. 256)

    # Build the full (TB, K) one-hot in registers: per-position ranges are
    # disjoint ([32s, 32s+32)), so OR of the per-position compares is exact.
    lane = lax.broadcasted_iota(jnp.int32, (tb, k), 1)
    match = lane == tok_c[:, 0:1]
    for s in range(1, seq_len):              # static, fully unrolled (VALU only)
        match = jnp.logical_or(match, lane == tok_c[:, s:s + 1])
    onehot = match.astype(jnp.bfloat16)      # (TB, K) bf16

    # First layer: single K=256 bf16 MXU dot, f32 accumulate, bias+ReLU in f32.
    h = jnp.dot(onehot, w1_ref[...], preferred_element_type=jnp.float32)
    h = jnp.maximum(h + b1, 0.0)

    # Remaining hidden layers: ReLU(h @ W + b), bf16 inputs, f32 accumulate.
    for i in range(1, n_hidden):
        w = params[2 * i][...]
        b = params[2 * i + 1][...]
        h = jnp.dot(h.astype(jnp.bfloat16), w,
                    preferred_element_type=jnp.float32)
        h = jnp.maximum(h + b, 0.0)

    # Output layer (padded to LANE columns; padded columns/bias are zero).
    w_out = params[-2][...]
    b_out = params[-1][...]
    logits = jnp.dot(h.astype(jnp.bfloat16), w_out,
                     preferred_element_type=jnp.float32) + b_out    # (TB, LANE)
    logits = logits[:, :out_size]            # keep only the valid lanes

    if out_size != 1:
        # Softmax over the valid lanes only; approx reciprocal runs on the EUP.
        m = jnp.max(logits, axis=-1, keepdims=True)
        e = jnp.exp(logits - m)
        denom = jnp.sum(e, axis=-1, keepdims=True)
        out_ref[...] = e * pl.reciprocal(denom, approx=True)
    else:
        # Sigmoid via one EUP op: sigmoid(x) = 0.5*tanh(0.5*x) + 0.5
        out_ref[...] = 0.5 * jnp.tanh(0.5 * logits) + 0.5


# --------------------------------------------------------------------------
# Parameter preparation (padding + bf16 weights)
# --------------------------------------------------------------------------
def prepare_padded_params(params, *, seq_len):
    """Pad (in,out)-layout weights / (1,out) biases to TPU-friendly shapes.

    First-layer weight (S*VOCAB, H1) -> fused (S*VOCAB_PAD, H1_pad) bf16.
    All other weights zero-padded to multiples of 128 lanes and cast to bf16.
    Biases stay f32, padded to 128 lanes.
    """
    (w1, b1) = params[0]
    h1 = w1.shape[1]
    h1p = _ceil_to(h1, LANE)
    w1r = w1.reshape(seq_len, VOCAB, h1)
    w1p = jnp.zeros((seq_len, VOCAB_PAD, h1p), jnp.float32)
    w1p = w1p.at[:, :VOCAB, :h1].set(w1r)
    w1f = w1p.reshape(seq_len * VOCAB_PAD, h1p).astype(jnp.bfloat16)
    b1p = jnp.zeros((1, h1p), jnp.float32).at[:, :h1].set(b1)

    padded = [(w1f, b1p)]
    prev, prevp = h1, h1p
    for (w, b) in params[1:]:
        n = w.shape[1]
        npad = _ceil_to(n, LANE)
        wp = (jnp.zeros((prevp, npad), jnp.float32)
              .at[:prev, :n].set(w).astype(jnp.bfloat16))
        bp = jnp.zeros((1, npad), jnp.float32).at[:, :n].set(b)
        padded.append((wp, bp))
        prev, prevp = n, npad
    return padded


# --------------------------------------------------------------------------
# Wrapper
# --------------------------------------------------------------------------
def dnn_forward(tokens, params, *, seq_len, out_size, batch_tile=None):
    """tokens: int array (B, seq_len) with values in [0, VOCAB)."""
    B = tokens.shape[0]

    padded = prepare_padded_params(params, seq_len=seq_len)
    flat = []
    for (w, b) in padded:
        flat += [w, b]
    n_hidden = len(padded) - 1

    # Batch tile: sublane-aligned, capped (tunable), and chosen so the grid has
    # >= 2 steps when possible (keeps both v7x TensorCores busy).  Never larger
    # than B itself, so small batches get an exact, unpadded single block.
    cap = 2048 if batch_tile is None else batch_tile
    tb = min(_ceil_to(pl.cdiv(B, 2), 8), _ceil_to(cap, 8))
    tb = min(tb, B)
    grid = pl.cdiv(B, tb)

    # Pre-offset tokens: tok_c[b, s] = tok[b, s] + 32*s  (tiny fused XLA op,
    # tokens stay (B, S) int32 in HBM -- the one-hot is built in-register).
    tok_c = tokens.astype(jnp.int32) + (
        VOCAB_PAD * jnp.arange(seq_len, dtype=jnp.int32))[None, :]

    def _resident_spec(arr):
        zeros = (0,) * arr.ndim
        # Constant index_map: the block stays resident in VMEM across grid
        # steps.  Total weight footprint is < 0.3 MiB even double-buffered.
        return pl.BlockSpec(arr.shape, lambda i, z=zeros: z)

    kernel = partial(_dnn_kernel, out_size, n_hidden)
    result = pl.pallas_call(
        kernel,
        out_shape=jax.ShapeDtypeStruct((B, out_size), jnp.float32),
        grid=(grid,),
        in_specs=[pl.BlockSpec((tb, seq_len), lambda i: (i, 0))]
        + [_resident_spec(a) for a in flat],
        out_specs=pl.BlockSpec((tb, out_size), lambda i: (i, 0)),
        compiler_params=pltpu.CompilerParams(
            dimension_semantics=("parallel",),
            vmem_limit_bytes=32 * 1024 * 1024,
        ),
    )(tok_c, *flat)

    return result


# --------------------------------------------------------------------------
# Init + pure-JAX reference (mirrors the PyTorch module)
# --------------------------------------------------------------------------
def init_params(key, dims):
    """PyTorch nn.Linear default init: U(-1/sqrt(fan_in), 1/sqrt(fan_in))."""
    params = []
    for i in range(1, len(dims)):
        fan_in = dims[i - 1]
        bound = 1.0 / (fan_in ** 0.5)
        key, kw, kb = jax.random.split(key, 3)
        w = jax.random.uniform(kw, (dims[i - 1], dims[i]), jnp.float32, -bound, bound)
        b = jax.random.uniform(kb, (1, dims[i]), jnp.float32, -bound, bound)
        params.append((w, b))
    return params


def reference_forward(tokens, params, *, seq_len, out_size):
    B = tokens.shape[0]
    x = jax.nn.one_hot(tokens.astype(jnp.int32), VOCAB, dtype=jnp.float32)
    x = x.reshape(B, seq_len * VOCAB)
    for (w, b) in params[:-1]:
        x = jax.nn.relu(x @ w + b)
    w, b = params[-1]
    x = x @ w + b
    if out_size != 1:
        return jax.nn.softmax(x, axis=-1)
    return jax.nn.sigmoid(x)


if __name__ == "__main__":
    # model_specs analogue of the PyTorch test configuration
    model_specs = {
        "batch_size": 2,
        "n_hid_lyrs": 2,
        "output_size": 4,
        "seq_len": 8,
        "ARCH": [32, 32],
    }
    seq_len = model_specs["seq_len"]
    out_size = model_specs["output_size"]
    emb_size = VOCAB                                   # self.embed = False
    arch = [emb_size * seq_len] + model_specs["ARCH"]  # [136, 32, 32]
    dims = arch + [out_size]                           # [136, 32, 32, 4]

    key = jax.random.PRNGKey(0)
    key, k_tok, k_par = jax.random.split(key, 3)
    tokens = jax.random.randint(
        k_tok, (model_specs["batch_size"], seq_len), 0, VOCAB, dtype=jnp.int32
    )
    params = init_params(k_par, dims)

    out = dnn_forward(tokens, params, seq_len=seq_len, out_size=out_size)
    out = jax.block_until_ready(out)

    ref = reference_forward(tokens, params, seq_len=seq_len, out_size=out_size)
    assert out.shape == (model_specs["batch_size"], out_size)
    # Tolerance relaxed vs the f32 reference: the kernel runs bf16 matmuls on
    # the MXU and uses the EUP approximate reciprocal for softmax normalization.
    assert jnp.allclose(out, ref, atol=5e-3, rtol=5e-3)
    assert jnp.allclose(jnp.sum(out, axis=-1), 1.0, atol=5e-3)

    print("KERNEL_OK")
</pallas_src>

<mosaic_0001>
module attributes {stable_mosaic.version = 11 : i64} {
  func.func @_dnn_kernel(%arg0: i32, %arg1: memref<2x8xi32, #tpu.memory_space<vmem>>, %arg2: memref<256x128xbf16, #tpu.memory_space<vmem>>, %arg3: memref<1x128xf32, #tpu.memory_space<vmem>>, %arg4: memref<128x128xbf16, #tpu.memory_space<vmem>>, %arg5: memref<1x128xf32, #tpu.memory_space<vmem>>, %arg6: memref<128x128xbf16, #tpu.memory_space<vmem>>, %arg7: memref<1x128xf32, #tpu.memory_space<vmem>>, %arg8: memref<2x4xf32, #tpu.memory_space<vmem>>) attributes {dimension_semantics = [#tpu.dimension_semantics<parallel>], iteration_bounds = array<i64: 1>, scalar_prefetch = 0 : i64, scratch_operands = 0 : i64, tpu.core_type = #tpu.core_type<tc>, window_params = [{transform_indices = @transform_0, window_bounds = array<i64: 2, 8>}, {pipeline_mode = #tpu.pipeline_mode<synchronous>, transform_indices = @transform_1, window_bounds = array<i64: 256, 128>}, {pipeline_mode = #tpu.pipeline_mode<synchronous>, transform_indices = @transform_2, window_bounds = array<i64: 1, 128>}, {pipeline_mode = #tpu.pipeline_mode<synchronous>, transform_indices = @transform_3, window_bounds = array<i64: 128, 128>}, {pipeline_mode = #tpu.pipeline_mode<synchronous>, transform_indices = @transform_4, window_bounds = array<i64: 1, 128>}, {pipeline_mode = #tpu.pipeline_mode<synchronous>, transform_indices = @transform_5, window_bounds = array<i64: 128, 128>}, {pipeline_mode = #tpu.pipeline_mode<synchronous>, transform_indices = @transform_6, window_bounds = array<i64: 1, 128>}, {transform_indices = @transform_7, window_bounds = array<i64: 2, 4>}]} {
    %c0 = arith.constant 0 : index
    %c0_0 = arith.constant 0 : index
    %0 = vector.load %arg3[%c0, %c0_0] : memref<1x128xf32, #tpu.memory_space<vmem>>, vector<1x128xf32>
    %c0_1 = arith.constant 0 : index
    %c0_2 = arith.constant 0 : index
    %1 = vector.load %arg1[%c0_1, %c0_2] : memref<2x8xi32, #tpu.memory_space<vmem>>, vector<2x8xi32>
    %2 = tpu.iota {dimensions = array<i32: 1>} : vector<2x256xi32>
    %3 = vector.extract_strided_slice %1 {offsets = [0, 0], sizes = [2, 1], strides = [1, 1]} : vector<2x8xi32> to vector<2x1xi32>
    %4 = vector.broadcast %3 : vector<2x1xi32> to vector<2x256xi32>
    %5 = arith.cmpi eq, %2, %4 : vector<2x256xi32>
    %6 = vector.extract_strided_slice %1 {offsets = [0, 1], sizes = [2, 1], strides = [1, 1]} : vector<2x8xi32> to vector<2x1xi32>
    %7 = vector.broadcast %6 : vector<2x1xi32> to vector<2x256xi32>
    %8 = arith.cmpi eq, %2, %7 : vector<2x256xi32>
    %9 = arith.ori %5, %8 : vector<2x256xi1>
    %10 = vector.extract_strided_slice %1 {offsets = [0, 2], sizes = [2, 1], strides = [1, 1]} : vector<2x8xi32> to vector<2x1xi32>
    %11 = vector.broadcast %10 : vector<2x1xi32> to vector<2x256xi32>
    %12 = arith.cmpi eq, %2, %11 : vector<2x256xi32>
    %13 = arith.ori %9, %12 : vector<2x256xi1>
    %14 = vector.extract_strided_slice %1 {offsets = [0, 3], sizes = [2, 1], strides = [1, 1]} : vector<2x8xi32> to vector<2x1xi32>
    %15 = vector.broadcast %14 : vector<2x1xi32> to vector<2x256xi32>
    %16 = arith.cmpi eq, %2, %15 : vector<2x256xi32>
    %17 = arith.ori %13, %16 : vector<2x256xi1>
    %18 = vector.extract_strided_slice %1 {offsets = [0, 4], sizes = [2, 1], strides = [1, 1]} : vector<2x8xi32> to vector<2x1xi32>
    %19 = vector.broadcast %18 : vector<2x1xi32> to vector<2x256xi32>
    %20 = arith.cmpi eq, %2, %19 : vector<2x256xi32>
    %21 = arith.ori %17, %20 : vector<2x256xi1>
    %22 = vector.extract_strided_slice %1 {offsets = [0, 5], sizes = [2, 1], strides = [1, 1]} : vector<2x8xi32> to vector<2x1xi32>
    %23 = vector.broadcast %22 : vector<2x1xi32> to vector<2x256xi32>
    %24 = arith.cmpi eq, %2, %23 : vector<2x256xi32>
    %25 = arith.ori %21, %24 : vector<2x256xi1>
    %26 = vector.extract_strided_slice %1 {offsets = [0, 6], sizes = [2, 1], strides = [1, 1]} : vector<2x8xi32> to vector<2x1xi32>
    %27 = vector.broadcast %26 : vector<2x1xi32> to vector<2x256xi32>
    %28 = arith.cmpi eq, %2, %27 : vector<2x256xi32>
    %29 = arith.ori %25, %28 : vector<2x256xi1>
    %30 = vector.extract_strided_slice %1 {offsets = [0, 7], sizes = [2, 1], strides = [1, 1]} : vector<2x8xi32> to vector<2x1xi32>
    %31 = vector.broadcast %30 : vector<2x1xi32> to vector<2x256xi32>
    %32 = arith.cmpi eq, %2, %31 : vector<2x256xi32>
    %33 = arith.ori %29, %32 : vector<2x256xi1>
    %34 = arith.extui %33 : vector<2x256xi1> to vector<2x256xi32>
    %35 = arith.sitofp %34 : vector<2x256xi32> to vector<2x256xf32>
    %36 = arith.truncf %35 : vector<2x256xf32> to vector<2x256xbf16>
    %c0_3 = arith.constant 0 : index
    %c0_4 = arith.constant 0 : index
    %37 = vector.load %arg2[%c0_3, %c0_4] : memref<256x128xbf16, #tpu.memory_space<vmem>>, vector<256x128xbf16>
    %cst = arith.constant dense<0.000000e+00> : vector<2x128xf32>
    %38 = tpu.matmul %36, %37, %cst {dimension_numbers = #tpu.dot_dimension_numbers<[1], [0], [0], [1], [0, 0, 1, 1], [], []>} : vector<2x256xbf16>, vector<256x128xbf16>, vector<2x128xf32> -> vector<2x128xf32>
    %39 = vector.broadcast %0 : vector<1x128xf32> to vector<2x128xf32>
    %40 = arith.addf %38, %39 : vector<2x128xf32>
    %cst_5 = arith.constant 0.000000e+00 : f32
    %41 = vector.broadcast %cst_5 : f32 to vector<2x128xf32>
    %42 = arith.maximumf %40, %41 : vector<2x128xf32>
    %c0_6 = arith.constant 0 : index
    %c0_7 = arith.constant 0 : index
    %43 = vector.load %arg4[%c0_6, %c0_7] : memref<128x128xbf16, #tpu.memory_space<vmem>>, vector<128x128xbf16>
    %c0_8 = arith.constant 0 : index
    %c0_9 = arith.constant 0 : index
    %44 = vector.load %arg5[%c0_8, %c0_9] : memref<1x128xf32, #tpu.memory_space<vmem>>, vector<1x128xf32>
    %45 = arith.truncf %42 : vector<2x128xf32> to vector<2x128xbf16>
    %cst_10 = arith.constant dense<0.000000e+00> : vector<2x128xf32>
    %46 = tpu.matmul %45, %43, %cst_10 {dimension_numbers = #tpu.dot_dimension_numbers<[1], [0], [0], [1], [0, 0, 1, 1], [], []>} : vector<2x128xbf16>, vector<128x128xbf16>, vector<2x128xf32> -> vector<2x128xf32>
    %47 = vector.broadcast %44 : vector<1x128xf32> to vector<2x128xf32>
    %48 = arith.addf %46, %47 : vector<2x128xf32>
    %cst_11 = arith.constant 0.000000e+00 : f32
    %49 = vector.broadcast %cst_11 : f32 to vector<2x128xf32>
    %50 = arith.maximumf %48, %49 : vector<2x128xf32>
    %c0_12 = arith.constant 0 : index
    %c0_13 = arith.constant 0 : index
    %51 = vector.load %arg6[%c0_12, %c0_13] : memref<128x128xbf16, #tpu.memory_space<vmem>>, vector<128x128xbf16>
    %c0_14 = arith.constant 0 : index
    %c0_15 = arith.constant 0 : index
    %52 = vector.load %arg7[%c0_14, %c0_15] : memref<1x128xf32, #tpu.memory_space<vmem>>, vector<1x128xf32>
    %53 = arith.truncf %50 : vector<2x128xf32> to vector<2x128xbf16>
    %cst_16 = arith.constant dense<0.000000e+00> : vector<2x128xf32>
    %54 = tpu.matmul %53, %51, %cst_16 {dimension_numbers = #tpu.dot_dimension_numbers<[1], [0], [0], [1], [0, 0, 1, 1], [], []>} : vector<2x128xbf16>, vector<128x128xbf16>, vector<2x128xf32> -> vector<2x128xf32>
    %55 = vector.broadcast %52 : vector<1x128xf32> to vector<2x128xf32>
    %56 = arith.addf %54, %55 : vector<2x128xf32>
    %57 = vector.extract_strided_slice %56 {offsets = [0, 0], sizes = [2, 4], strides = [1, 1]} : vector<2x128xf32> to vector<2x4xf32>
    %cst_17 = arith.constant dense<0xFF800000> : vector<2xf32>
    %58 = vector.multi_reduction <maximumf>, %57, %cst_17 [1] : vector<2x4xf32> to vector<2xf32>
    %59 = vector.shape_cast %58 : vector<2xf32> to vector<2x1xf32>
    %60 = vector.broadcast %59 : vector<2x1xf32> to vector<2x4xf32>
    %61 = arith.subf %57, %60 : vector<2x4xf32>
    %62 = math.exp %61 : vector<2x4xf32>
    %cst_18 = arith.constant dense<0.000000e+00> : vector<2xf32>
    %63 = vector.multi_reduction <add>, %62, %cst_18 [1] : vector<2x4xf32> to vector<2xf32>
    %64 = vector.shape_cast %63 : vector<2xf32> to vector<2x1xf32>
    %65 = tpu.reciprocal %64 {approx = true} : vector<2x1xf32> -> vector<2x1xf32>
    %66 = vector.broadcast %65 : vector<2x1xf32> to vector<2x4xf32>
    %67 = arith.mulf %62, %66 : vector<2x4xf32>
    %c0_19 = arith.constant 0 : index
    %c0_20 = arith.constant 0 : index
    %68 = vector.load %arg8[%c0_19, %c0_20] : memref<2x4xf32, #tpu.memory_space<vmem>>, vector<2x4xf32>
    tpu.vector_store %arg8[%c0_19, %c0_20], %67 {strides = array<i32>} : memref<2x4xf32, #tpu.memory_space<vmem>>, vector<2x4xf32>,
    return
  }
  func.func @transform_0(%arg0: i32) -> (i32, i32) {
    %c0_i32 = arith.constant 0 : i32
    %c0_i32_0 = arith.constant 0 : i32
    return %arg0, %c0_i32 : i32, i32
  }
  func.func @transform_1(%arg0: i32) -> (i32, i32) {
    %c0_i32 = arith.constant 0 : i32
    %c0_i32_0 = arith.constant 0 : i32
    %c0_i32_1 = arith.constant 0 : i32
    return %c0_i32, %c0_i32_0 : i32, i32
  }
  func.func @transform_2(%arg0: i32) -> (i32, i32) {
    %c0_i32 = arith.constant 0 : i32
    %c0_i32_0 = arith.constant 0 : i32
    %c0_i32_1 = arith.constant 0 : i32
    return %c0_i32, %c0_i32_0 : i32, i32
  }
  func.func @transform_3(%arg0: i32) -> (i32, i32) {
    %c0_i32 = arith.constant 0 : i32
    %c0_i32_0 = arith.constant 0 : i32
    %c0_i32_1 = arith.constant 0 : i32
    return %c0_i32, %c0_i32_0 : i32, i32
  }
  func.func @transform_4(%arg0: i32) -> (i32, i32) {
    %c0_i32 = arith.constant 0 : i32
    %c0_i32_0 = arith.constant 0 : i32
    %c0_i32_1 = arith.constant 0 : i32
    return %c0_i32, %c0_i32_0 : i32, i32
  }
  func.func @transform_5(%arg0: i32) -> (i32, i32) {
    %c0_i32 = arith.constant 0 : i32
    %c0_i32_0 = arith.constant 0 : i32
    %c0_i32_1 = arith.constant 0 : i32
    return %c0_i32, %c0_i32_0 : i32, i32
  }
  func.func @transform_6(%arg0: i32) -> (i32, i32) {
    %c0_i32 = arith.constant 0 : i32
    %c0_i32_0 = arith.constant 0 : i32
    %c0_i32_1 = arith.constant 0 : i32
    return %c0_i32, %c0_i32_0 : i32, i32
  }
  func.func @transform_7(%arg0: i32) -> (i32, i32) {
    %c0_i32 = arith.constant 0 : i32
    %c0_i32_0 = arith.constant 0 : i32
    return %arg0, %c0_i32 : i32, i32
  }
}

</mosaic_0001>

<llo_original>
// kernel: tpu_custom_call.1
$region0: #{tpu_custom_call.1}
  #allocation0 [shape = 'u32[]', space=smem, size = 0x4, offset = 0x4, fixed_abs, tag = 'smem constant byte address 0x4 - core index']
  #allocation1 [shape = 'u32[72,128]{1,0:T(1,128)}', space=vmem, size = 0x9000, scoped, tag = 'internal scratch']
  %s0 = inlined_call_operand.hbm [shape: s32[2,8], index: 0, kind: input, shape index: {}]
  %s1 = inlined_call_operand.hbm [shape: bf16[256,128], index: 1, kind: input, shape index: {}]
  %s2 = inlined_call_operand.vmem [shape: f32[1,128], index: 2, kind: input, shape index: {}]
  %s3 = inlined_call_operand.hbm [shape: bf16[128,128], index: 3, kind: input, shape index: {}]
  %s4 = inlined_call_operand.vmem [shape: f32[1,128], index: 4, kind: input, shape index: {}]
  %s5 = inlined_call_operand.hbm [shape: bf16[128,128], index: 5, kind: input, shape index: {}]
  %s6 = inlined_call_operand.vmem [shape: f32[1,128], index: 6, kind: input, shape index: {}]
  %s7 = inlined_call_operand.hbm [shape: f32[2,4], index: 7, kind: output, shape index: {}]
  %s8 = sld [smem:[#allocation0]]
  $region54: #{tpu_custom_call.1} parent=0
    _
  %s10 = ssub.s32 1, %s8
  %s11 = scalar_select 0, %s10, %s8
  $region1: #{tpu_custom_call.1} parent=0
    #allocation2 [shape = 'u8[1024]{0}', space=vmem, size = 0x400, scoped, tag = 'input window, operand 0, single buffered']
    #allocation3 [shape = 's32[1]{0}', space=sflag, size = 0x4, scoped, tag = 'scoped memory for tpu_custom_call.1']
    #allocation4 [shape = 's32[1]{0}', space=sflag, size = 0x4, scoped, tag = 'scoped memory for tpu_custom_call.1']
    #allocation5 [shape = 'u8[65536]{0}', space=vmem, size = 0x10000, scoped, tag = 'input window, operand 1, single buffered']
    #allocation6 [shape = 's32[1]{0}', space=sflag, size = 0x4, scoped, tag = 'scoped memory for tpu_custom_call.1']
    #allocation7 [shape = 'u8[32768]{0}', space=vmem, size = 0x8000, scoped, tag = 'input window, operand 3, single buffered']
    #allocation8 [shape = 'u8[32768]{0}', space=vmem, size = 0x8000, scoped, tag = 'input window, operand 5, single buffered']
    #allocation9 [shape = 's32[1]{0}', space=sflag, size = 0x4, scoped, tag = 'scoped memory for tpu_custom_call.1']
    #allocation10 [shape = 'u8[1024]{0}', space=vmem, size = 0x400, scoped, tag = 'output window, operand 0, single buffered']
    %12 = vsyncpa [#allocation3], 0
    %13 = vsyncpa [#allocation6], 0
    %14 = vsyncpa [#allocation9], 0
    %15 = vsyncpa [#allocation4], 0
    // Predicated region
    $region2: #{tpu_custom_call.1} parent=1 // pred_check
      _
    $region3: #{tpu_custom_call.1} parent=1 // pred_check_branch
      %17 = sbr.rel (0) target = $region5
    $region4: #{tpu_custom_call.1} parent=1 // pred_region
      %19 = vsyncadd [#allocation3], 0
      %s21 = sshll.u32 %s0, 4
      %s22 = int_to_ptr.hbm [resolvable:$true] %s21
      %s23 = sshll.u32 [#allocation2], 4
      %s24 = int_to_ptr.vmem [resolvable:$true] %s23
      %26 = dma.hbm_to_vmem [thread:$0]  %s22, 32, %s24, [#allocation3]
    $region5: #{tpu_custom_call.1} parent=1 // pred_fallthru
      _
    // Predicated region
    $region6: #{tpu_custom_call.1} parent=1 // pred_check
      _
    $region7: #{tpu_custom_call.1} parent=1 // pred_check_branch
      %28 = sbr.rel (0) target = $region9
    $region8: #{tpu_custom_call.1} parent=1 // pred_region
      %30 = vsyncadd [#allocation6], 0
      %s31 = sshll.u32 %s1, 4
      %s32 = int_to_ptr.hbm [resolvable:$true] %s31
      %s33 = sshll.u32 [#allocation5], 4
      %s34 = int_to_ptr.vmem [resolvable:$true] %s33
      %39 = dma.hbm_to_vmem [thread:$0]  %s32, 2048, %s34, [#allocation6], 64, 64, 4
    $region9: #{tpu_custom_call.1} parent=1 // pred_fallthru
      _
    // Predicated region
    $region10: #{tpu_custom_call.1} parent=1 // pred_check
      _
    $region11: #{tpu_custom_call.1} parent=1 // pred_check_branch
      %41 = sbr.rel (0) target = $region13
    $region12: #{tpu_custom_call.1} parent=1 // pred_region
      _
    $region13: #{tpu_custom_call.1} parent=1 // pred_fallthru
      _
    // Predicated region
    $region14: #{tpu_custom_call.1} parent=1 // pred_check
      _
    $region15: #{tpu_custom_call.1} parent=1 // pred_check_branch
      %43 = sbr.rel (0) target = $region17
    $region16: #{tpu_custom_call.1} parent=1 // pred_region
      %45 = vsyncadd [#allocation6], 0
      %s46 = sshll.u32 %s3, 4
      %s47 = int_to_ptr.hbm [resolvable:$true] %s46
      %s48 = sshll.u32 [#allocation7], 4
      %s49 = int_to_ptr.vmem [resolvable:$true] %s48
      %54 = dma.hbm_to_vmem [thread:$0]  %s47, 1024, %s49, [#allocation6], 64, 64, 4
    $region17: #{tpu_custom_call.1} parent=1 // pred_fallthru
      _
    // Predicated region
    $region18: #{tpu_custom_call.1} parent=1 // pred_check
      _
    $region19: #{tpu_custom_call.1} parent=1 // pred_check_branch
      %56 = sbr.rel (0) target = $region21
    $region20: #{tpu_custom_call.1} parent=1 // pred_region
      _
    $region21: #{tpu_custom_call.1} parent=1 // pred_fallthru
      _
    // Predicated region
    $region22: #{tpu_custom_call.1} parent=1 // pred_check
      _
    $region23: #{tpu_custom_call.1} parent=1 // pred_check_branch
      %58 = sbr.rel (0) target = $region25
    $region24: #{tpu_custom_call.1} parent=1 // pred_region
      %60 = vsyncadd [#allocation9], 0
      %s61 = sshll.u32 %s5, 4
      %s62 = int_to_ptr.hbm [resolvable:$true] %s61
      %s63 = sshll.u32 [#allocation8], 4
      %s64 = int_to_ptr.vmem [resolvable:$true] %s63
      %69 = dma.hbm_to_vmem [thread:$0]  %s62, 1024, %s64, [#allocation9], 64, 64, 4
    $region25: #{tpu_custom_call.1} parent=1 // pred_fallthru
      _
    // Predicated region
    $region26: #{tpu_custom_call.1} parent=1 // pred_check
      _
    $region27: #{tpu_custom_call.1} parent=1 // pred_check_branch
      %71 = sbr.rel (0) target = $region29
    $region28: #{tpu_custom_call.1} parent=1 // pred_region
      _
    $region29: #{tpu_custom_call.1} parent=1 // pred_fallthru
      _
    // Predicated region
    $region30: #{tpu_custom_call.1} parent=1 // pred_check
      _
    $region31: #{tpu_custom_call.1} parent=1 // pred_check_branch
      %73 = sbr.rel (0) target = $region33
    $region32: #{tpu_custom_call.1} parent=1 // pred_region
      %75 = dma.done [#allocation3], 32
    $region33: #{tpu_custom_call.1} parent=1 // pred_fallthru
      _
    // Predicated region
    $region34: #{tpu_custom_call.1} parent=1 // pred_check
      _
    $region35: #{tpu_custom_call.1} parent=1 // pred_check_branch
      %77 = sbr.rel (0) target = $region37
    $region36: #{tpu_custom_call.1} parent=1 // pred_region
      %79 = dma.done [#allocation6], 2048
    $region37: #{tpu_custom_call.1} parent=1 // pred_fallthru
      _
    // Predicated region
    $region38: #{tpu_custom_call.1} parent=1 // pred_check
      _
    $region39: #{tpu_custom_call.1} parent=1 // pred_check_branch
      %81 = sbr.rel (0) target = $region41
    $region40: #{tpu_custom_call.1} parent=1 // pred_region
      %83 = dma.done [#allocation6], 1024
    $region41: #{tpu_custom_call.1} parent=1 // pred_fallthru
      _
    // Predicated region
    $region42: #{tpu_custom_call.1} parent=1 // pred_check
      _
    $region43: #{tpu_custom_call.1} parent=1 // pred_check_branch
      %85 = sbr.rel (0) target = $region45
    $region44: #{tpu_custom_call.1} parent=1 // pred_region
      %87 = dma.done [#allocation9], 1024
    $region45: #{tpu_custom_call.1} parent=1 // pred_fallthru
      _
    %v88 = vld [vmem:[%s2] sm:$0x1]
    %v89 = vld [vmem:[#allocation2] sm:$0x3]
    %v90 = vlaneseq
    %v91 = vand.u32 %v90, 127
    %v92 = vadd.s32 %v91, 128
    %93 = vset.pattern.permute.xlu0 0
    %94 = vperm.xlu0 %93, %v89
    %v95 = vpop.permute.xlu0 %94
    %vm96 = vcmp.eq.s32.totalorder %v91, %v95
    %vm97 = vcmp.eq.s32.totalorder %v92, %v95
    %98 = vset.pattern.permute.xlu0 1
    %99 = vperm.xlu0 %98, %v89
    %v100 = vpop.permute.xlu0 %99
    %vm101 = vcmp.eq.s32.totalorder %v91, %v100
    %vm102 = vcmp.eq.s32.totalorder %v92, %v100
    %vm103 = vmor %vm96, %vm101
    %vm104 = vmor %vm97, %vm102
    %105 = vset.pattern.permute.xlu0 2
    %106 = vperm.xlu0 %105, %v89
    %v107 = vpop.permute.xlu0 %106
    %vm108 = vcmp.eq.s32.totalorder %v91, %v107
    %vm109 = vcmp.eq.s32.totalorder %v92, %v107
    %vm110 = vmor %vm103, %vm108
    %vm111 = vmor %vm104, %vm109
    %112 = vset.pattern.permute.xlu0 3
    %113 = vperm.xlu0 %112, %v89
    %v114 = vpop.permute.xlu0 %113
    %vm115 = vcmp.eq.s32.totalorder %v91, %v114
    %vm116 = vcmp.eq.s32.totalorder %v92, %v114
    %vm117 = vmor %vm110, %vm115
    %vm118 = vmor %vm111, %vm116
    %119 = vset.pattern.permute.xlu0 4
    %120 = vperm.xlu0 %119, %v89
    %v121 = vpop.permute.xlu0 %120
    %vm122 = vcmp.eq.s32.totalorder %v91, %v121
    %vm123 = vcmp.eq.s32.totalorder %v92, %v121
    %vm124 = vmor %vm117, %vm122
    %vm125 = vmor %vm118, %vm123
    %126 = vset.pattern.permute.xlu0 5
    %127 = vperm.xlu0 %126, %v89
    %v128 = vpop.permute.xlu0 %127
    %vm129 = vcmp.eq.s32.totalorder %v91, %v128
    %vm130 = vcmp.eq.s32.totalorder %v92, %v128
    %vm131 = vmor %vm124, %vm129
    %vm132 = vmor %vm125, %vm130
    %133 = vset.pattern.permute.xlu0 6
    %134 = vperm.xlu0 %133, %v89
    %v135 = vpop.permute.xlu0 %134
    %vm136 = vcmp.eq.s32.totalorder %v91, %v135
    %vm137 = vcmp.eq.s32.totalorder %v92, %v135
    %vm138 = vmor %vm131, %vm136
    %vm139 = vmor %vm132, %vm137
    %140 = vset.pattern.permute.xlu0 7
    %141 = vperm.xlu0 %140, %v89
    %v142 = vpop.permute.xlu0 %141
    %vm143 = vcmp.eq.s32.totalorder %v91, %v142
    %vm144 = vcmp.eq.s32.totalorder %v92, %v142
    %vm145 = vmor %vm138, %vm143
    %vm146 = vmor %vm139, %vm144
    %v147 = vsel %vm145, 1, 0
    %v148 = vsel %vm146, 1, 0
    %v149 = vcvt.s32.f32 %v147
    %v150 = vcvt.s32.f32 %v148
    %v151 = vpack.c.bf16 %v149, %v149
    %v152 = vpack.c.bf16 %v150, %v150
    %v153 = vld [vmem:[#allocation5] sm:$0xf]
    %v154 = vld [vmem:[#allocation5 + $0x4] sm:$0xf]
    %v155 = vld [vmem:[#allocation5 + $0x8] sm:$0xf]
    %v156 = vld [vmem:[#allocation5 + $0xc] sm:$0xf]
    %v157 = vld [vmem:[#allocation5 + $0x10] sm:$0xf]
    %v158 = vld [vmem:[#allocation5 + $0x14] sm:$0xf]
    %v159 = vld [vmem:[#allocation5 + $0x18] sm:$0xf]
    %v160 = vld [vmem:[#allocation5 + $0x1c] sm:$0xf]
    %v161 = vld [vmem:[#allocation5 + $0x20] sm:$0xf]
    %v162 = vld [vmem:[#allocation5 + $0x24] sm:$0xf]
    %v163 = vld [vmem:[#allocation5 + $0x28] sm:$0xf]
    %v164 = vld [vmem:[#allocation5 + $0x2c] sm:$0xf]
    %v165 = vld [vmem:[#allocation5 + $0x30] sm:$0xf]
    %v166 = vld [vmem:[#allocation5 + $0x34] sm:$0xf]
    %v167 = vld [vmem:[#allocation5 + $0x38] sm:$0xf]
    %v168 = vld [vmem:[#allocation5 + $0x3c] sm:$0xf]
    %v169 = vld [vmem:[#allocation5 + $0x40] sm:$0xf]
    %v170 = vld [vmem:[#allocation5 + $0x44] sm:$0xf]
    %v171 = vld [vmem:[#allocation5 + $0x48] sm:$0xf]
    %v172 = vld [vmem:[#allocation5 + $0x4c] sm:$0xf]
    %v173 = vld [vmem:[#allocation5 + $0x50] sm:$0xf]
    %v174 = vld [vmem:[#allocation5 + $0x54] sm:$0xf]
    %v175 = vld [vmem:[#allocation5 + $0x58] sm:$0xf]
    %v176 = vld [vmem:[#allocation5 + $0x5c] sm:$0xf]
    %v177 = vld [vmem:[#allocation5 + $0x60] sm:$0xf]
    %v178 = vld [vmem:[#allocation5 + $0x64] sm:$0xf]
    %v179 = vld [vmem:[#allocation5 + $0x68] sm:$0xf]
    %v180 = vld [vmem:[#allocation5 + $0x6c] sm:$0xf]
    %v181 = vld [vmem:[#allocation5 + $0x70] sm:$0xf]
    %v182 = vld [vmem:[#allocation5 + $0x74] sm:$0xf]
    %v183 = vld [vmem:[#allocation5 + $0x78] sm:$0xf]
    %v184 = vld [vmem:[#allocation5 + $0x7c] sm:$0xf]
    %v186 = vperm.slane %v88, 0
    %v220 = vunpack.c.l.b16 %v153
    %v221 = vunpack.c.l.b16 %v154
    %v222 = vunpack.c.l.b16 %v155
    %v223 = vunpack.c.l.b16 %v156
    %v224 = vunpack.c.l.b16 %v157
    %v225 = vunpack.c.l.b16 %v158
    %v226 = vunpack.c.l.b16 %v159
    %v227 = vunpack.c.l.b16 %v160
    %v228 = vunpack.c.l.b16 %v161
    %v229 = vunpack.c.l.b16 %v162
    %v230 = vunpack.c.l.b16 %v163
    %v231 = vunpack.c.l.b16 %v164
    %v232 = vunpack.c.l.b16 %v165
    %v233 = vunpack.c.l.b16 %v166
    %v234 = vunpack.c.l.b16 %v167
    %v235 = vunpack.c.l.b16 %v168
    %v236 = vunpack.c.l.b16 %v169
    %v237 = vunpack.c.l.b16 %v170
    %v238 = vunpack.c.l.b16 %v171
    %v239 = vunpack.c.l.b16 %v172
    %v240 = vunpack.c.l.b16 %v173
    %v241 = vunpack.c.l.b16 %v174
    %v242 = vunpack.c.l.b16 %v175
    %v243 = vunpack.c.l.b16 %v176
    %v244 = vunpack.c.l.b16 %v177
    %v245 = vunpack.c.l.b16 %v178
    %v246 = vunpack.c.l.b16 %v179
    %v247 = vunpack.c.l.b16 %v180
    %v248 = vunpack.c.l.b16 %v181
    %v249 = vunpack.c.l.b16 %v182
    %v250 = vunpack.c.l.b16 %v183
    %v251 = vunpack.c.l.b16 %v184
    %v252 = vpack.c.b16 %v221, %v220
    %v253 = vpack.c.b16 %v223, %v222
    %v254 = vpack.c.b16 %v225, %v224
    %v255 = vpack.c.b16 %v227, %v226
    %v256 = vpack.c.b16 %v229, %v228
    %v257 = vpack.c.b16 %v231, %v230
    %v258 = vpack.c.b16 %v233, %v232
    %v259 = vpack.c.b16 %v235, %v234
    %v260 = vpack.c.b16 %v237, %v236
    %v261 = vpack.c.b16 %v239, %v238
    %v262 = vpack.c.b16 %v241, %v240
    %v263 = vpack.c.b16 %v243, %v242
    %v264 = vpack.c.b16 %v245, %v244
    %v265 = vpack.c.b16 %v247, %v246
    %v266 = vpack.c.b16 %v249, %v248
    %v267 = vpack.c.b16 %v251, %v250
    %284 = vmatpush.bf16.msra.mxu0 %v259
    %285 = vmatpush.bf16.msra.mxu0 %v258
    %286 = vmatpush.bf16.msra.mxu0 %v257
    %287 = vmatpush.bf16.msra.mxu0 %v256
    %288 = vmatpush.bf16.msra.mxu0 %v255
    %289 = vmatpush.bf16.msra.mxu0 %v254
    %290 = vmatpush.bf16.msra.mxu0 %v253
    %291 = vmatpush.bf16.msra.mxu0 %v252
    %292 = vmatmul.bf16.gmra.mxu0 %v151
    %v293 = vpop.f32.mrf.mxu0
    %v294 = vadd.f32 %v186, %v293
    %v295 = vpop.f32.mrf.mxu0
    %296 = vdwg.mxu0
    %297 = vmatpush.bf16.msra.mxu0 %v267
    %298 = vmatpush.bf16.msra.mxu0 %v266
    %299 = vmatpush.bf16.msra.mxu0 %v265
    %300 = vmatpush.bf16.msra.mxu0 %v264
    %301 = vmatpush.bf16.msra.mxu0 %v263
    %302 = vmatpush.bf16.msra.mxu0 %v262
    %303 = vmatpush.bf16.msra.mxu0 %v261
    %304 = vmatpush.bf16.msra.mxu0 %v260
    %305 = vmatmul.bf16.gmra.mxu0 %v152
    %v306 = vpop.f32.mrf.mxu0
    %v307 = vadd.f32 %v294, %v306
    %v308 = vpop.f32.mrf.mxu0
    %309 = vdwg.mxu0
    %v310 = vmax.f32 %v307, 0.0
    %v311 = vld [vmem:[#allocation7] sm:$0xf]
    %v312 = vld [vmem:[#allocation7 + $0x4] sm:$0xf]
    %v313 = vld [vmem:[#allocation7 + $0x8] sm:$0xf]
    %v314 = vld [vmem:[#allocation7 + $0xc] sm:$0xf]
    %v315 = vld [vmem:[#allocation7 + $0x10] sm:$0xf]
    %v316 = vld [vmem:[#allocation7 + $0x14] sm:$0xf]
    %v317 = vld [vmem:[#allocation7 + $0x18] sm:$0xf]
    %v318 = vld [vmem:[#allocation7 + $0x1c] sm:$0xf]
    %v319 = vld [vmem:[#allocation7 + $0x20] sm:$0xf]
    %v320 = vld [vmem:[#allocation7 + $0x24] sm:$0xf]
    %v321 = vld [vmem:[#allocation7 + $0x28] sm:$0xf]
    %v322 = vld [vmem:[#allocation7 + $0x2c] sm:$0xf]
    %v323 = vld [vmem:[#allocation7 + $0x30] sm:$0xf]
    %v324 = vld [vmem:[#allocation7 + $0x34] sm:$0xf]
    %v325 = vld [vmem:[#allocation7 + $0x38] sm:$0xf]
    %v326 = vld [vmem:[#allocation7 + $0x3c] sm:$0xf]
    %v327 = vld [vmem:[%s4] sm:$0x1]
    %v328 = vpack.c.bf16 %v310, %v310
    %v330 = vperm.slane %v327, 0
    %v348 = vunpack.c.l.b16 %v311
    %v349 = vunpack.c.l.b16 %v312
    %v350 = vunpack.c.l.b16 %v313
    %v351 = vunpack.c.l.b16 %v314
    %v352 = vunpack.c.l.b16 %v315
    %v353 = vunpack.c.l.b16 %v316
    %v354 = vunpack.c.l.b16 %v317
    %v355 = vunpack.c.l.b16 %v318
    %v356 = vunpack.c.l.b16 %v319
    %v357 = vunpack.c.l.b16 %v320
    %v358 = vunpack.c.l.b16 %v321
    %v359 = vunpack.c.l.b16 %v322
    %v360 = vunpack.c.l.b16 %v323
    %v361 = vunpack.c.l.b16 %v324
    %v362 = vunpack.c.l.b16 %v325
    %v363 = vunpack.c.l.b16 %v326
    %v364 = vpack.c.b16 %v349, %v348
    %v365 = vpack.c.b16 %v351, %v350
    %v366 = vpack.c.b16 %v353, %v352
    %v367 = vpack.c.b16 %v355, %v354
    %v368 = vpack.c.b16 %v357, %v356
    %v369 = vpack.c.b16 %v359, %v358
    %v370 = vpack.c.b16 %v361, %v360
    %v371 = vpack.c.b16 %v363, %v362
    %380 = vmatpush.bf16.msra.mxu0 %v371
    %381 = vmatpush.bf16.msra.mxu0 %v370
    %382 = vmatpush.bf16.msra.mxu0 %v369
    %383 = vmatpush.bf16.msra.mxu0 %v368
    %384 = vmatpush.bf16.msra.mxu0 %v367
    %385 = vmatpush.bf16.msra.mxu0 %v366
    %386 = vmatpush.bf16.msra.mxu0 %v365
    %387 = vmatpush.bf16.msra.mxu0 %v364
    %388 = vmatmul.bf16.gmra.mxu0 %v328
    %v389 = vpop.f32.mrf.mxu0
    %v390 = vadd.f32 %v330, %v389
    %v391 = vpop.f32.mrf.mxu0
    %392 = vdwg.mxu0
    %v393 = vmax.f32 %v390, 0.0
    %v394 = vld [vmem:[#allocation8] sm:$0xf]
    %v395 = vld [vmem:[#allocation8 + $0x4] sm:$0xf]
    %v396 = vld [vmem:[#allocation8 + $0x8] sm:$0xf]
    %v397 = vld [vmem:[#allocation8 + $0xc] sm:$0xf]
    %v398 = vld [vmem:[#allocation8 + $0x10] sm:$0xf]
    %v399 = vld [vmem:[#allocation8 + $0x14] sm:$0xf]
    %v400 = vld [vmem:[#allocation8 + $0x18] sm:$0xf]
    %v401 = vld [vmem:[#allocation8 + $0x1c] sm:$0xf]
    %v402 = vld [vmem:[#allocation8 + $0x20] sm:$0xf]
    %v403 = vld [vmem:[#allocation8 + $0x24] sm:$0xf]
    %v404 = vld [vmem:[#allocation8 + $0x28] sm:$0xf]
    %v405 = vld [vmem:[#allocation8 + $0x2c] sm:$0xf]
    %v406 = vld [vmem:[#allocation8 + $0x30] sm:$0xf]
    %v407 = vld [vmem:[#allocation8 + $0x34] sm:$0xf]
    %v408 = vld [vmem:[#allocation8 + $0x38] sm:$0xf]
    %v409 = vld [vmem:[#allocation8 + $0x3c] sm:$0xf]
    %v410 = vld [vmem:[%s6] sm:$0x1]
    %v411 = vpack.c.bf16 %v393, %v393
    %v413 = vperm.slane %v410, 0
    %v431 = vunpack.c.l.b16 %v394
    %v432 = vunpack.c.l.b16 %v395
    %v433 = vunpack.c.l.b16 %v396
    %v434 = vunpack.c.l.b16 %v397
    %v435 = vunpack.c.l.b16 %v398
    %v436 = vunpack.c.l.b16 %v399
    %v437 = vunpack.c.l.b16 %v400
    %v438 = vunpack.c.l.b16 %v401
    %v439 = vunpack.c.l.b16 %v402
    %v440 = vunpack.c.l.b16 %v403
    %v441 = vunpack.c.l.b16 %v404
    %v442 = vunpack.c.l.b16 %v405
    %v443 = vunpack.c.l.b16 %v406
    %v444 = vunpack.c.l.b16 %v407
    %v445 = vunpack.c.l.b16 %v408
    %v446 = vunpack.c.l.b16 %v409
    %v447 = vpack.c.b16 %v432, %v431
    %v448 = vpack.c.b16 %v434, %v433
    %v449 = vpack.c.b16 %v436, %v435
    %v450 = vpack.c.b16 %v438, %v437
    %v451 = vpack.c.b16 %v440, %v439
    %v452 = vpack.c.b16 %v442, %v441
    %v453 = vpack.c.b16 %v444, %v443
    %v454 = vpack.c.b16 %v446, %v445
    %463 = vmatpush.bf16.msra.mxu0 %v454
    %464 = vmatpush.bf16.msra.mxu0 %v453
    %465 = vmatpush.bf16.msra.mxu0 %v452
    %466 = vmatpush.bf16.msra.mxu0 %v451
    %467 = vmatpush.bf16.msra.mxu0 %v450
    %468 = vmatpush.bf16.msra.mxu0 %v449
    %469 = vmatpush.bf16.msra.mxu0 %v448
    %470 = vmatpush.bf16.msra.mxu0 %v447
    %471 = vmatmul.bf16.gmra.mxu0 %v411
    %v472 = vpop.f32.mrf.mxu0
    %v473 = vadd.f32 %v413, %v472
    %v474 = vpop.f32.mrf.mxu0
    %475 = vdwg.mxu0
    %vm476 = vcmask 25600
    %v477 = vsel %vm476, %v473, -inf
    %478 = vmax.xlane.f32.xlu0 %v477
    %v479 = vpop.xlane.xlu0 %478
    %v480 = vsub.f32 %v473, %v479
    %v481 = vmul.f32 %v480, 1.442695
    %v482 = vpow.pop %v481
    %v483 = vsel %vm476, %v482, 0.0
    %484 = vadd.xlane.f32.xlu0 %v483
    %v485 = vpop.xlane.xlu0 %484
    %v486 = vrcp.pop %v485
    %v487 = vmul.f32 %v482, %v486
    %488 = vst.msk [vmem:[#allocation10] sm:$0x3] %vm476, %v487
    // Predicated region
    $region46: #{tpu_custom_call.1} parent=1 // pred_check
      _
    $region47: #{tpu_custom_call.1} parent=1 // pred_check_branch
      %490 = sbr.rel (0) target = $region49
    $region48: #{tpu_custom_call.1} parent=1 // pred_region
      %492 = vsyncadd [#allocation4], 0
      %s494 = sshll.u32 [#allocation10], 4
      %s495 = int_to_ptr.vmem [resolvable:$true] %s494
      %s496 = sshll.u32 %s7, 4
      %s497 = int_to_ptr.hbm [resolvable:$true] %s496
      %499 = dma.vmem_to_hbm [thread:$0]  %s495, 32, %s497, [#allocation4]
    $region49: #{tpu_custom_call.1} parent=1 // pred_fallthru
      _
    // Predicated region
    $region50: #{tpu_custom_call.1} parent=1 // pred_check
      _
    $region51: #{tpu_custom_call.1} parent=1 // pred_check_branch
      %501 = sbr.rel (0) target = $region53
    $region52: #{tpu_custom_call.1} parent=1 // pred_region
      %503 = dma.done [#allocation4], 32
    $region53: #{tpu_custom_call.1} parent=1 // pred_fallthru
      _
    %504 = vsyncpa [#allocation3], 1
    %505 = vsyncpa [#allocation6], 1
    %506 = vsyncpa [#allocation9], 1
    %507 = vsyncpa [#allocation4], 1

</llo_original>
